<compile_context>
chip_gen: v7x
topology: tpu7x:2x2x1
jax: 0.10.0
libtpu: 0.0.40
codegen_flags: <defaults>
</compile_context>

<pallas_src>
import functools

import jax
import jax.numpy as jnp
from jax import lax
from jax.experimental import pallas as pl
from jax.experimental.pallas import tpu as pltpu


def _round_up(x, m):
    return ((x + m - 1) // m) * m


def _cdiv(a, b):
    return -(-a // b)


def _mnr_loss_kernel(a_ref, p_ref, n_ref, o_ref, *, inv_temperature, batch_true,
                     tile_b, num_negatives):
    """One batch tile.

    a_ref : (TILE_B, D)       anchors (native dtype)
    p_ref : (TILE_B, D)       positives
    n_ref : (TILE_B, N, D)    negatives
    o_ref : (1, 8, 128)       per-tile partial loss sum (broadcast-filled)
    """
    eps2 = jnp.float32(1e-16)   # eps = 1e-8 applied to the squared norms
    inv_t = jnp.float32(inv_temperature)

    a = a_ref[...].astype(jnp.float32)                      # (TB, D)
    p = p_ref[...].astype(jnp.float32)                      # (TB, D)

    sumsq_a = jnp.sum(a * a, axis=-1, keepdims=True)        # (TB, 1)
    sumsq_p = jnp.sum(p * p, axis=-1, keepdims=True)        # (TB, 1)
    dot_ap = jnp.sum(a * p, axis=-1, keepdims=True)         # (TB, 1)

    # 1 / max(||x||, eps) == rsqrt(max(||x||^2, eps^2))  (F.cosine_similarity clamp)
    inv_a = lax.rsqrt(jnp.maximum(sumsq_a, eps2))
    inv_p = lax.rsqrt(jnp.maximum(sumsq_p, eps2))
    s_ap = dot_ap * inv_a * inv_p * inv_t                   # (TB, 1) positive logit

    # Online single-pass logsumexp over [s_ap, s_an_0, ..., s_an_{N-1}].
    # Each negative is processed as a dense (TB, D) slab: its dot with the
    # anchor, its squared norm and its logit are fused, so no (TB, N, D) f32
    # broadcast temporary is ever materialized.
    m = s_ap
    acc = jnp.ones_like(s_ap)
    for k in range(num_negatives):          # static + tiny -> fully unrolled
        n_k = n_ref[:, k, :].astype(jnp.float32)             # (TB, D)
        dot_k = jnp.sum(a * n_k, axis=-1, keepdims=True)     # (TB, 1)
        ss_k = jnp.sum(n_k * n_k, axis=-1, keepdims=True)    # (TB, 1)
        inv_nk = lax.rsqrt(jnp.maximum(ss_k, eps2))
        s_k = dot_k * inv_a * inv_nk * inv_t                 # (TB, 1) negative logit
        m_new = jnp.maximum(m, s_k)
        acc = acc * jnp.exp(m - m_new) + jnp.exp(s_k - m_new)
        m = m_new

    # cross_entropy(target=0) per row = logsumexp(logits) - logits[0]
    per_row = m + jnp.log(acc) - s_ap                        # (TB, 1)

    # Mask ragged-tail rows (grid is cdiv(B, tile_b); no batch-pad HBM pass).
    row = (pl.program_id(0) * tile_b
           + lax.broadcasted_iota(jnp.int32, (tile_b, 1), 0))
    per_row = jnp.where(row < batch_true, per_row, 0.0)

    tile_sum = jnp.sum(per_row, keepdims=True)               # (1, 1)
    o_ref[...] = jnp.broadcast_to(tile_sum, (1, 8, 128))


def _vmem_budget_bytes():
    """(per-tile working-set budget, scoped VMEM limit), per TPU generation."""
    cap = 64 * 1024 * 1024
    try:
        info = pltpu.get_tpu_info()
        cap = int(getattr(info, "vmem_capacity_bytes", cap))
    except Exception:
        pass
    if cap > 96 * 1024 * 1024:                      # v5e / v6e: 128 MiB per core
        return 28 * 1024 * 1024, 64 * 1024 * 1024
    return 12 * 1024 * 1024, 32 * 1024 * 1024       # v7x: 64 MiB per core


def mnr_loss(anchor_emb, pos_emb, neg_embs, temperature=1.0):
    """Pallas implementation of MNRLoss.forward.

    anchor_emb: (B, D)
    pos_emb:    (B, D)
    neg_embs:   (B * N, D)
    returns scalar float32 loss.
    """
    B, D = anchor_emb.shape
    assert neg_embs.shape[0] % B == 0, "neg_embs rows must be a multiple of batch"
    N = neg_embs.shape[0] // B
    assert N >= 1, "need at least one negative per anchor"
    neg3 = neg_embs.reshape(B, N, D)        # metadata-only reshape (no HBM copy)

    in_itemsize = jnp.dtype(anchor_emb.dtype).itemsize
    budget, vmem_limit = _vmem_budget_bytes()

    # ---- batch tile: biggest that fits the budget; >=2 tiles when possible ----
    d_lanes = _round_up(D, 128)             # VMEM-internal lane padding
    n_sub = _round_up(N, 8)                 # VMEM-internal sublane padding of (N, D)

    def _tile_bytes(tb):
        dma = 2 * (2 * tb * d_lanes + tb * n_sub * d_lanes) * in_itemsize  # dbl-buffered inputs
        work = 4 * tb * d_lanes * 4          # f32 a, p, n_k + one temporary
        return dma + work

    tile_b = 1024
    while tile_b > 8 and _tile_bytes(tile_b) > budget:
        tile_b //= 2
    if B > 8:
        # Guarantee at least two grid tiles so v7x's two TensorCores both get work.
        tile_b = min(tile_b, _round_up(_cdiv(B, 2), 8))
    tile_b = min(tile_b, _round_up(B, 8))
    if B < 8:
        tile_b = B                           # block dim == full array dim

    num_tiles = _cdiv(B, tile_b)             # ragged tail handled by in-kernel mask

    kernel = functools.partial(
        _mnr_loss_kernel,
        inv_temperature=1.0 / float(temperature),
        batch_true=B,
        tile_b=tile_b,
        num_negatives=N,
    )

    partials = pl.pallas_call(
        kernel,
        grid=(num_tiles,),
        in_specs=[
            pl.BlockSpec((tile_b, D), lambda i: (i, 0)),
            pl.BlockSpec((tile_b, D), lambda i: (i, 0)),
            pl.BlockSpec((tile_b, N, D), lambda i: (i, 0, 0)),
        ],
        out_specs=pl.BlockSpec((1, 8, 128), lambda i: (i, 0, 0)),
        out_shape=jax.ShapeDtypeStruct((num_tiles, 8, 128), jnp.float32),
        compiler_params=pltpu.CompilerParams(
            dimension_semantics=("parallel",),
            vmem_limit_bytes=vmem_limit,
        ),
    )(anchor_emb, pos_emb, neg3)

    # One partial sum per tile; reduce in the wrapper, divide by the true B.
    return jnp.sum(partials[:, 0, 0]) / jnp.float32(B)


def _mnr_loss_ref(anchor_emb, pos_emb, neg_embs, temperature=1.0):
    """Pure-JAX reference mirroring the PyTorch module (per-norm eps clamp)."""
    eps = 1e-8
    B, D = anchor_emb.shape
    N = neg_embs.shape[0] // B
    a = anchor_emb.astype(jnp.float32)
    p = pos_emb.astype(jnp.float32)
    n = neg_embs.astype(jnp.float32).reshape(B, N, D)

    def cos(x, y):
        nx = jnp.maximum(jnp.linalg.norm(x, axis=-1), eps)
        ny = jnp.maximum(jnp.linalg.norm(y, axis=-1), eps)
        return jnp.sum(x * y, axis=-1) / (nx * ny)

    s_ap = cos(a, p) / temperature                       # (B,)
    s_an = cos(a[:, None, :], n) / temperature           # (B, N)
    logits = jnp.concatenate([s_ap[:, None], s_an], axis=1)
    lse = jax.scipy.special.logsumexp(logits, axis=-1)
    return jnp.mean(lse - logits[:, 0])


if __name__ == "__main__":
    key = jax.random.PRNGKey(0)

    # --- test 1: small, aligned-ish shapes --------------------------------
    k1, k2, k3 = jax.random.split(key, 3)
    batch, embed_dim, num_negatives = 8, 32, 4
    anchor = jax.random.normal(k1, (batch, embed_dim), dtype=jnp.float32)
    pos = jax.random.normal(k2, (batch, embed_dim), dtype=jnp.float32)
    negs = jax.random.normal(k3, (batch * num_negatives, embed_dim),
                             dtype=jnp.float32)

    loss = jax.block_until_ready(mnr_loss(anchor, pos, negs, temperature=1.0))
    ref = _mnr_loss_ref(anchor, pos, negs, temperature=1.0)
    assert jnp.allclose(loss, ref, atol=1e-5, rtol=1e-5), (loss, ref)

    # --- test 2: ragged batch / unaligned D (exercises cdiv grid + mask) ---
    k4, k5, k6 = jax.random.split(jax.random.PRNGKey(1), 3)
    batch2, embed_dim2, num_negatives2 = 13, 48, 3
    anchor2 = jax.random.normal(k4, (batch2, embed_dim2), dtype=jnp.float32)
    pos2 = jax.random.normal(k5, (batch2, embed_dim2), dtype=jnp.float32)
    negs2 = jax.random.normal(k6, (batch2 * num_negatives2, embed_dim2),
                              dtype=jnp.float32)

    loss2 = jax.block_until_ready(mnr_loss(anchor2, pos2, negs2, temperature=0.5))
    ref2 = _mnr_loss_ref(anchor2, pos2, negs2, temperature=0.5)
    assert jnp.allclose(loss2, ref2, atol=1e-5, rtol=1e-5), (loss2, ref2)

    # --- test 3: bf16 inputs stream at half the HBM bytes ------------------
    k7, k8, k9 = jax.random.split(jax.random.PRNGKey(2), 3)
    batch3, embed_dim3, num_negatives3 = 16, 64, 2
    anchor3 = jax.random.normal(k7, (batch3, embed_dim3)).astype(jnp.bfloat16)
    pos3 = jax.random.normal(k8, (batch3, embed_dim3)).astype(jnp.bfloat16)
    negs3 = jax.random.normal(
        k9, (batch3 * num_negatives3, embed_dim3)).astype(jnp.bfloat16)

    loss3 = jax.block_until_ready(mnr_loss(anchor3, pos3, negs3, temperature=0.7))
    ref3 = _mnr_loss_ref(anchor3, pos3, negs3, temperature=0.7)
    assert jnp.allclose(loss3, ref3, atol=1e-4, rtol=1e-4), (loss3, ref3)

    print("KERNEL_OK")
</pallas_src>

<mosaic_0001>
module attributes {stable_mosaic.version = 11 : i64} {
  func.func @_mnr_loss_kernel(%arg0: i32, %arg1: memref<8x32xf32, #tpu.memory_space<vmem>>, %arg2: memref<8x32xf32, #tpu.memory_space<vmem>>, %arg3: memref<8x4x32xf32, #tpu.memory_space<vmem>>, %arg4: memref<1x8x128xf32, #tpu.memory_space<vmem>>) attributes {dimension_semantics = [#tpu.dimension_semantics<parallel>], iteration_bounds = array<i64: 1>, scalar_prefetch = 0 : i64, scratch_operands = 0 : i64, tpu.core_type = #tpu.core_type<tc>, window_params = [{transform_indices = @transform_0, window_bounds = array<i64: 8, 32>}, {transform_indices = @transform_1, window_bounds = array<i64: 8, 32>}, {transform_indices = @transform_2, window_bounds = array<i64: 8, 4, 32>}, {transform_indices = @transform_3, window_bounds = array<i64: 1, 8, 128>}]} {
    %c0 = arith.constant 0 : index
    %c0_0 = arith.constant 0 : index
    %0 = vector.load %arg1[%c0, %c0_0] : memref<8x32xf32, #tpu.memory_space<vmem>>, vector<8x32xf32>
    %c0_1 = arith.constant 0 : index
    %c0_2 = arith.constant 0 : index
    %1 = vector.load %arg2[%c0_1, %c0_2] : memref<8x32xf32, #tpu.memory_space<vmem>>, vector<8x32xf32>
    %2 = arith.mulf %0, %0 : vector<8x32xf32>
    %cst = arith.constant dense<0.000000e+00> : vector<8xf32>
    %3 = vector.multi_reduction <add>, %2, %cst [1] : vector<8x32xf32> to vector<8xf32>
    %4 = vector.shape_cast %3 : vector<8xf32> to vector<8x1xf32>
    %5 = arith.mulf %1, %1 : vector<8x32xf32>
    %cst_3 = arith.constant dense<0.000000e+00> : vector<8xf32>
    %6 = vector.multi_reduction <add>, %5, %cst_3 [1] : vector<8x32xf32> to vector<8xf32>
    %7 = vector.shape_cast %6 : vector<8xf32> to vector<8x1xf32>
    %8 = arith.mulf %0, %1 : vector<8x32xf32>
    %cst_4 = arith.constant dense<0.000000e+00> : vector<8xf32>
    %9 = vector.multi_reduction <add>, %8, %cst_4 [1] : vector<8x32xf32> to vector<8xf32>
    %10 = vector.shape_cast %9 : vector<8xf32> to vector<8x1xf32>
    %cst_5 = arith.constant 1.000000e-16 : f32
    %11 = vector.broadcast %cst_5 : f32 to vector<8x1xf32>
    %12 = arith.maximumf %4, %11 : vector<8x1xf32>
    %13 = math.rsqrt %12 : vector<8x1xf32>
    %cst_6 = arith.constant 1.000000e-16 : f32
    %14 = vector.broadcast %cst_6 : f32 to vector<8x1xf32>
    %15 = arith.maximumf %7, %14 : vector<8x1xf32>
    %16 = math.rsqrt %15 : vector<8x1xf32>
    %17 = arith.mulf %10, %13 : vector<8x1xf32>
    %18 = arith.mulf %17, %16 : vector<8x1xf32>
    %cst_7 = arith.constant 1.000000e+00 : f32
    %19 = vector.broadcast %cst_7 : f32 to vector<8x1xf32>
    %20 = arith.mulf %18, %19 : vector<8x1xf32>
    %cst_8 = arith.constant 1.000000e+00 : f32
    %21 = vector.broadcast %cst_8 : f32 to vector<8x1xf32>
    %c0_9 = arith.constant 0 : index
    %c0_10 = arith.constant 0 : index
    %c0_11 = arith.constant 0 : index
    %22 = vector.load %arg3[%c0_9, %c0_10, %c0_11] : memref<8x4x32xf32, #tpu.memory_space<vmem>>, vector<8x1x32xf32>
    %23 = vector.shape_cast %22 : vector<8x1x32xf32> to vector<8x32xf32>
    %24 = arith.mulf %0, %23 : vector<8x32xf32>
    %cst_12 = arith.constant dense<0.000000e+00> : vector<8xf32>
    %25 = vector.multi_reduction <add>, %24, %cst_12 [1] : vector<8x32xf32> to vector<8xf32>
    %26 = vector.shape_cast %25 : vector<8xf32> to vector<8x1xf32>
    %27 = arith.mulf %23, %23 : vector<8x32xf32>
    %cst_13 = arith.constant dense<0.000000e+00> : vector<8xf32>
    %28 = vector.multi_reduction <add>, %27, %cst_13 [1] : vector<8x32xf32> to vector<8xf32>
    %29 = vector.shape_cast %28 : vector<8xf32> to vector<8x1xf32>
    %cst_14 = arith.constant 1.000000e-16 : f32
    %30 = vector.broadcast %cst_14 : f32 to vector<8x1xf32>
    %31 = arith.maximumf %29, %30 : vector<8x1xf32>
    %32 = math.rsqrt %31 : vector<8x1xf32>
    %33 = arith.mulf %26, %13 : vector<8x1xf32>
    %34 = arith.mulf %33, %32 : vector<8x1xf32>
    %cst_15 = arith.constant 1.000000e+00 : f32
    %35 = vector.broadcast %cst_15 : f32 to vector<8x1xf32>
    %36 = arith.mulf %34, %35 : vector<8x1xf32>
    %37 = arith.maximumf %20, %36 : vector<8x1xf32>
    %38 = arith.subf %20, %37 : vector<8x1xf32>
    %39 = math.exp %38 : vector<8x1xf32>
    %40 = arith.mulf %21, %39 : vector<8x1xf32>
    %41 = arith.subf %36, %37 : vector<8x1xf32>
    %42 = math.exp %41 : vector<8x1xf32>
    %43 = arith.addf %40, %42 : vector<8x1xf32>
    %c0_16 = arith.constant 0 : index
    %c1 = arith.constant 1 : index
    %c0_17 = arith.constant 0 : index
    %44 = vector.load %arg3[%c0_16, %c1, %c0_17] : memref<8x4x32xf32, #tpu.memory_space<vmem>>, vector<8x1x32xf32>
    %45 = vector.shape_cast %44 : vector<8x1x32xf32> to vector<8x32xf32>
    %46 = arith.mulf %0, %45 : vector<8x32xf32>
    %cst_18 = arith.constant dense<0.000000e+00> : vector<8xf32>
    %47 = vector.multi_reduction <add>, %46, %cst_18 [1] : vector<8x32xf32> to vector<8xf32>
    %48 = vector.shape_cast %47 : vector<8xf32> to vector<8x1xf32>
    %49 = arith.mulf %45, %45 : vector<8x32xf32>
    %cst_19 = arith.constant dense<0.000000e+00> : vector<8xf32>
    %50 = vector.multi_reduction <add>, %49, %cst_19 [1] : vector<8x32xf32> to vector<8xf32>
    %51 = vector.shape_cast %50 : vector<8xf32> to vector<8x1xf32>
    %cst_20 = arith.constant 1.000000e-16 : f32
    %52 = vector.broadcast %cst_20 : f32 to vector<8x1xf32>
    %53 = arith.maximumf %51, %52 : vector<8x1xf32>
    %54 = math.rsqrt %53 : vector<8x1xf32>
    %55 = arith.mulf %48, %13 : vector<8x1xf32>
    %56 = arith.mulf %55, %54 : vector<8x1xf32>
    %cst_21 = arith.constant 1.000000e+00 : f32
    %57 = vector.broadcast %cst_21 : f32 to vector<8x1xf32>
    %58 = arith.mulf %56, %57 : vector<8x1xf32>
    %59 = arith.maximumf %37, %58 : vector<8x1xf32>
    %60 = arith.subf %37, %59 : vector<8x1xf32>
    %61 = math.exp %60 : vector<8x1xf32>
    %62 = arith.mulf %43, %61 : vector<8x1xf32>
    %63 = arith.subf %58, %59 : vector<8x1xf32>
    %64 = math.exp %63 : vector<8x1xf32>
    %65 = arith.addf %62, %64 : vector<8x1xf32>
    %c0_22 = arith.constant 0 : index
    %c2 = arith.constant 2 : index
    %c0_23 = arith.constant 0 : index
    %66 = vector.load %arg3[%c0_22, %c2, %c0_23] : memref<8x4x32xf32, #tpu.memory_space<vmem>>, vector<8x1x32xf32>
    %67 = vector.shape_cast %66 : vector<8x1x32xf32> to vector<8x32xf32>
    %68 = arith.mulf %0, %67 : vector<8x32xf32>
    %cst_24 = arith.constant dense<0.000000e+00> : vector<8xf32>
    %69 = vector.multi_reduction <add>, %68, %cst_24 [1] : vector<8x32xf32> to vector<8xf32>
    %70 = vector.shape_cast %69 : vector<8xf32> to vector<8x1xf32>
    %71 = arith.mulf %67, %67 : vector<8x32xf32>
    %cst_25 = arith.constant dense<0.000000e+00> : vector<8xf32>
    %72 = vector.multi_reduction <add>, %71, %cst_25 [1] : vector<8x32xf32> to vector<8xf32>
    %73 = vector.shape_cast %72 : vector<8xf32> to vector<8x1xf32>
    %cst_26 = arith.constant 1.000000e-16 : f32
    %74 = vector.broadcast %cst_26 : f32 to vector<8x1xf32>
    %75 = arith.maximumf %73, %74 : vector<8x1xf32>
    %76 = math.rsqrt %75 : vector<8x1xf32>
    %77 = arith.mulf %70, %13 : vector<8x1xf32>
    %78 = arith.mulf %77, %76 : vector<8x1xf32>
    %cst_27 = arith.constant 1.000000e+00 : f32
    %79 = vector.broadcast %cst_27 : f32 to vector<8x1xf32>
    %80 = arith.mulf %78, %79 : vector<8x1xf32>
    %81 = arith.maximumf %59, %80 : vector<8x1xf32>
    %82 = arith.subf %59, %81 : vector<8x1xf32>
    %83 = math.exp %82 : vector<8x1xf32>
    %84 = arith.mulf %65, %83 : vector<8x1xf32>
    %85 = arith.subf %80, %81 : vector<8x1xf32>
    %86 = math.exp %85 : vector<8x1xf32>
    %87 = arith.addf %84, %86 : vector<8x1xf32>
    %c0_28 = arith.constant 0 : index
    %c3 = arith.constant 3 : index
    %c0_29 = arith.constant 0 : index
    %88 = vector.load %arg3[%c0_28, %c3, %c0_29] : memref<8x4x32xf32, #tpu.memory_space<vmem>>, vector<8x1x32xf32>
    %89 = vector.shape_cast %88 : vector<8x1x32xf32> to vector<8x32xf32>
    %90 = arith.mulf %0, %89 : vector<8x32xf32>
    %cst_30 = arith.constant dense<0.000000e+00> : vector<8xf32>
    %91 = vector.multi_reduction <add>, %90, %cst_30 [1] : vector<8x32xf32> to vector<8xf32>
    %92 = vector.shape_cast %91 : vector<8xf32> to vector<8x1xf32>
    %93 = arith.mulf %89, %89 : vector<8x32xf32>
    %cst_31 = arith.constant dense<0.000000e+00> : vector<8xf32>
    %94 = vector.multi_reduction <add>, %93, %cst_31 [1] : vector<8x32xf32> to vector<8xf32>
    %95 = vector.shape_cast %94 : vector<8xf32> to vector<8x1xf32>
    %cst_32 = arith.constant 1.000000e-16 : f32
    %96 = vector.broadcast %cst_32 : f32 to vector<8x1xf32>
    %97 = arith.maximumf %95, %96 : vector<8x1xf32>
    %98 = math.rsqrt %97 : vector<8x1xf32>
    %99 = arith.mulf %92, %13 : vector<8x1xf32>
    %100 = arith.mulf %99, %98 : vector<8x1xf32>
    %cst_33 = arith.constant 1.000000e+00 : f32
    %101 = vector.broadcast %cst_33 : f32 to vector<8x1xf32>
    %102 = arith.mulf %100, %101 : vector<8x1xf32>
    %103 = arith.maximumf %81, %102 : vector<8x1xf32>
    %104 = arith.subf %81, %103 : vector<8x1xf32>
    %105 = math.exp %104 : vector<8x1xf32>
    %106 = arith.mulf %87, %105 : vector<8x1xf32>
    %107 = arith.subf %102, %103 : vector<8x1xf32>
    %108 = math.exp %107 : vector<8x1xf32>
    %109 = arith.addf %106, %108 : vector<8x1xf32>
    %110 = math.log %109 : vector<8x1xf32>
    %111 = arith.addf %103, %110 : vector<8x1xf32>
    %112 = arith.subf %111, %20 : vector<8x1xf32>
    %c8_i32 = arith.constant 8 : i32
    %113 = arith.muli %arg0, %c8_i32 : i32
    %114 = tpu.iota {dimensions = array<i32: 0>} : vector<8x1xi32>
    %115 = vector.broadcast %113 : i32 to vector<8x1xi32>
    %116 = arith.addi %115, %114 : vector<8x1xi32>
    %c8_i32_34 = arith.constant 8 : i32
    %117 = vector.broadcast %c8_i32_34 : i32 to vector<8x1xi32>
    %118 = arith.cmpi slt, %116, %117 : vector<8x1xi32>
    %cst_35 = arith.constant 0.000000e+00 : f32
    %119 = vector.broadcast %cst_35 : f32 to vector<8x1xf32>
    %120 = arith.select %118, %112, %119 : vector<8x1xi1>, vector<8x1xf32>
    %121 = vector.shape_cast %120 : vector<8x1xf32> to vector<1x8x1xf32>
    %cst_36 = arith.constant dense<0.000000e+00> : vector<1xf32>
    %122 = vector.multi_reduction <add>, %121, %cst_36 [1, 2] : vector<1x8x1xf32> to vector<1xf32>
    %123 = vector.shape_cast %122 : vector<1xf32> to vector<1x1x1xf32>
    %124 = vector.extract %123[0, 0, 0] : f32 from vector<1x1x1xf32>
    %125 = vector.broadcast %124 : f32 to vector<1x1xf32>
    %126 = vector.shape_cast %125 : vector<1x1xf32> to vector<1x1x1xf32>
    %127 = vector.broadcast %126 : vector<1x1x1xf32> to vector<1x8x128xf32>
    %c0_37 = arith.constant 0 : index
    %c0_38 = arith.constant 0 : index
    %c0_39 = arith.constant 0 : index
    %128 = vector.load %arg4[%c0_37, %c0_38, %c0_39] : memref<1x8x128xf32, #tpu.memory_space<vmem>>, vector<1x8x128xf32>
    tpu.vector_store %arg4[%c0_37, %c0_38, %c0_39], %127 {strides = array<i32>} : memref<1x8x128xf32, #tpu.memory_space<vmem>>, vector<1x8x128xf32>,
    return
  }
  func.func @transform_0(%arg0: i32) -> (i32, i32) {
    %c0_i32 = arith.constant 0 : i32
    %c0_i32_0 = arith.constant 0 : i32
    return %arg0, %c0_i32 : i32, i32
  }
  func.func @transform_1(%arg0: i32) -> (i32, i32) {
    %c0_i32 = arith.constant 0 : i32
    %c0_i32_0 = arith.constant 0 : i32
    return %arg0, %c0_i32 : i32, i32
  }
  func.func @transform_2(%arg0: i32) -> (i32, i32, i32) {
    %c0_i32 = arith.constant 0 : i32
    %c0_i32_0 = arith.constant 0 : i32
    %c0_i32_1 = arith.constant 0 : i32
    return %arg0, %c0_i32, %c0_i32_0 : i32, i32, i32
  }
  func.func @transform_3(%arg0: i32) -> (i32, i32, i32) {
    %c0_i32 = arith.constant 0 : i32
    %c0_i32_0 = arith.constant 0 : i32
    %c0_i32_1 = arith.constant 0 : i32
    return %arg0, %c0_i32, %c0_i32_0 : i32, i32, i32
  }
}

</mosaic_0001>

<llo_original>
// kernel: tpu_custom_call.1
$region0: #{tpu_custom_call.1}
  #allocation0 [shape = 'u32[]', space=smem, size = 0x4, offset = 0x4, fixed_abs, tag = 'smem constant byte address 0x4 - core index']
  #allocation1 [shape = 'u32[144,128]{1,0:T(1,128)}', space=vmem, size = 0x12000, scoped, tag = 'internal scratch']
  %s0 = inlined_call_operand.hbm [shape: f32[8,32], index: 0, kind: input, shape index: {}]
  %s1 = inlined_call_operand.hbm [shape: f32[8,32], index: 1, kind: input, shape index: {}]
  %s2 = inlined_call_operand.hbm [shape: f32[8,4,32], index: 2, kind: input, shape index: {}]
  %s3 = inlined_call_operand.hbm [shape: f32[1,8,128], index: 3, kind: output, shape index: {}]
  %s4 = sld [smem:[#allocation0]]
  $region34: #{tpu_custom_call.1} parent=0
    _
  %s6 = ssub.s32 1, %s4
  %s7 = scalar_select 0, %s6, %s4
  $region1: #{tpu_custom_call.1} parent=0
    #allocation2 [shape = 'u8[4096]{0}', space=vmem, size = 0x1000, scoped, tag = 'input window, operand 0, single buffered']
    #allocation3 [shape = 's32[1]{0}', space=sflag, size = 0x4, scoped, tag = 'scoped memory for tpu_custom_call.1']
    #allocation4 [shape = 's32[1]{0}', space=sflag, size = 0x4, scoped, tag = 'scoped memory for tpu_custom_call.1']
    #allocation5 [shape = 'u8[4096]{0}', space=vmem, size = 0x1000, scoped, tag = 'input window, operand 1, single buffered']
    #allocation6 [shape = 's32[1]{0}', space=sflag, size = 0x4, scoped, tag = 'scoped memory for tpu_custom_call.1']
    #allocation7 [shape = 'u8[16384]{0}', space=vmem, size = 0x4000, scoped, tag = 'input window, operand 2, single buffered']
    #allocation8 [shape = 'u8[4096]{0}', space=vmem, size = 0x1000, scoped, tag = 'output window, operand 0, single buffered']
    %8 = vsyncpa [#allocation3], 0
    %9 = vsyncpa [#allocation6], 0
    %10 = vsyncpa [#allocation4], 0
    // Predicated region
    $region2: #{tpu_custom_call.1} parent=1 // pred_check
      _
    $region3: #{tpu_custom_call.1} parent=1 // pred_check_branch
      %12 = sbr.rel (0) target = $region5
    $region4: #{tpu_custom_call.1} parent=1 // pred_region
      %s14 = ssub.s32 128, 128
      %15 = vsyncadd [#allocation3], %s14
      %s17 = sshll.u32 [#allocation2], 4
      %s18 = int_to_ptr.vmem [resolvable:$true] %s17
      %20 = dma.hbm_to_vmem [thread:$0]  %s0, 128, %s18, [#allocation3]
    $region5: #{tpu_custom_call.1} parent=1 // pred_fallthru
      _
    // Predicated region
    $region6: #{tpu_custom_call.1} parent=1 // pred_check
      _
    $region7: #{tpu_custom_call.1} parent=1 // pred_check_branch
      %22 = sbr.rel (0) target = $region9
    $region8: #{tpu_custom_call.1} parent=1 // pred_region
      %s24 = ssub.s32 128, 128
      %25 = vsyncadd [#allocation6], %s24
      %s27 = sshll.u32 [#allocation5], 4
      %s28 = int_to_ptr.vmem [resolvable:$true] %s27
      %30 = dma.hbm_to_vmem [thread:$0]  %s1, 128, %s28, [#allocation6]
    $region9: #{tpu_custom_call.1} parent=1 // pred_fallthru
      _
    // Predicated region
    $region10: #{tpu_custom_call.1} parent=1 // pred_check
      _
    $region11: #{tpu_custom_call.1} parent=1 // pred_check_branch
      %32 = sbr.rel (0) target = $region13
    $region12: #{tpu_custom_call.1} parent=1 // pred_region
      %s34 = ssub.s32 512, 512
      %35 = vsyncadd [#allocation6], %s34
      %s36 = sshll.u32 [#allocation7], 4
      %s37 = int_to_ptr.vmem [resolvable:$true] %s36
      %42 = dma.hbm_to_vmem [thread:$0]  %s2, 512, %s37, [#allocation6], 64, 64, 4
    $region13: #{tpu_custom_call.1} parent=1 // pred_fallthru
      _
    // Predicated region
    $region14: #{tpu_custom_call.1} parent=1 // pred_check
      _
    $region15: #{tpu_custom_call.1} parent=1 // pred_check_branch
      %44 = sbr.rel (0) target = $region17
    $region16: #{tpu_custom_call.1} parent=1 // pred_region
      %45 = dma.done [#allocation3], 128
    $region17: #{tpu_custom_call.1} parent=1 // pred_fallthru
      _
    // Predicated region
    $region18: #{tpu_custom_call.1} parent=1 // pred_check
      _
    $region19: #{tpu_custom_call.1} parent=1 // pred_check_branch
      %47 = sbr.rel (0) target = $region21
    $region20: #{tpu_custom_call.1} parent=1 // pred_region
      %48 = dma.done [#allocation6], 128
    $region21: #{tpu_custom_call.1} parent=1 // pred_fallthru
      _
    // Predicated region
    $region22: #{tpu_custom_call.1} parent=1 // pred_check
      _
    $region23: #{tpu_custom_call.1} parent=1 // pred_check_branch
      %50 = sbr.rel (0) target = $region25
    $region24: #{tpu_custom_call.1} parent=1 // pred_region
      %51 = dma.done [#allocation6], 512
    $region25: #{tpu_custom_call.1} parent=1 // pred_fallthru
      _
    %v52 = vld [vmem:[#allocation2] sm:$0xff]
    %v53 = vld [vmem:[#allocation5] sm:$0xff]
    %v54 = vmul.f32 %v52, %v52
    %vm55 = vcmask 261120
    %v56 = vsel %vm55, %v54, 0.0
    %57 = vadd.xlane.f32.xlu0 %v56
    %v58 = vpop.xlane.xlu0 %57
    %v59 = vmul.f32 %v53, %v53
    %v60 = vsel %vm55, %v59, 0.0
    %61 = vadd.xlane.f32.xlu0 %v60
    %v62 = vpop.xlane.xlu0 %61
    %v63 = vmul.f32 %v52, %v53
    %v64 = vsel %vm55, %v63, 0.0
    %65 = vadd.xlane.f32.xlu0 %v64
    %v66 = vpop.xlane.xlu0 %65
    %v67 = vmax.f32 %v58, 1e-16
    %v68 = vrsqrt.pop %v67
    %v69 = vmax.f32 %v62, 1e-16
    %v70 = vrsqrt.pop %v69
    %v71 = vmul.f32 %v66, %v68
    %v72 = vmul.f32 %v71, %v70
    %v73 = vld [vmem:[#allocation7] sm:$0x1]
    %v74 = vld [vmem:[#allocation7 + $0x4] sm:$0x1]
    %v75 = vld [vmem:[#allocation7 + $0x8] sm:$0x1]
    %v76 = vld [vmem:[#allocation7 + $0xc] sm:$0x1]
    %v77 = vld [vmem:[#allocation7 + $0x10] sm:$0x1]
    %v78 = vld [vmem:[#allocation7 + $0x14] sm:$0x1]
    %v79 = vld [vmem:[#allocation7 + $0x18] sm:$0x1]
    %v80 = vld [vmem:[#allocation7 + $0x1c] sm:$0x1]
    %v89 = vrot.slane %v74, 7
    %vm90 = vcmask 1041409
    %v91 = vsel %vm90, %v89, %v73
    %v92 = vrot.slane %v75, 6
    %vm93 = vcmask 1042434
    %v94 = vsel %vm93, %v92, %v91
    %v95 = vrot.slane %v76, 5
    %vm96 = vcmask 1043459
    %v97 = vsel %vm96, %v95, %v94
    %v98 = vrot.slane %v77, 4
    %vm99 = vcmask 1044484
    %v100 = vsel %vm99, %v98, %v97
    %v101 = vrot.slane %v78, 3
    %vm102 = vcmask 1045509
    %v103 = vsel %vm102, %v101, %v100
    %v104 = vrot.slane %v79, 2
    %vm105 = vcmask 1046534
    %v106 = vsel %vm105, %v104, %v103
    %v107 = vrot.slane %v80, 1
    %vm108 = vcmask 1047559
    %v109 = vsel %vm108, %v107, %v106
    %v111 = vmul.f32 %v52, %v109
    %v112 = vsel %vm55, %v111, 0.0
    %113 = vadd.xlane.f32.xlu0 %v112
    %v114 = vpop.xlane.xlu0 %113
    %v115 = vmul.f32 %v73, %v73
    %v116 = vmul.f32 %v74, %v74
    %v117 = vmul.f32 %v75, %v75
    %v118 = vmul.f32 %v76, %v76
    %v119 = vmul.f32 %v77, %v77
    %v120 = vmul.f32 %v78, %v78
    %v121 = vmul.f32 %v79, %v79
    %v122 = vmul.f32 %v80, %v80
    %v131 = vrot.slane %v116, 7
    %v132 = vsel %vm90, %v131, %v115
    %v133 = vrot.slane %v117, 6
    %v134 = vsel %vm93, %v133, %v132
    %v135 = vrot.slane %v118, 5
    %v136 = vsel %vm96, %v135, %v134
    %v137 = vrot.slane %v119, 4
    %v138 = vsel %vm99, %v137, %v136
    %v139 = vrot.slane %v120, 3
    %v140 = vsel %vm102, %v139, %v138
    %v141 = vrot.slane %v121, 2
    %v142 = vsel %vm105, %v141, %v140
    %v143 = vrot.slane %v122, 1
    %v144 = vsel %vm108, %v143, %v142
    %v146 = vsel %vm55, %v144, 0.0
    %147 = vadd.xlane.f32.xlu0 %v146
    %v148 = vpop.xlane.xlu0 %147
    %v149 = vmax.f32 %v148, 1e-16
    %v150 = vrsqrt.pop %v149
    %v151 = vmul.f32 %v114, %v68
    %v152 = vmul.f32 %v151, %v150
    %v153 = vmax.f32 %v72, %v152
    %v154 = vsub.f32 %v72, %v153
    %v155 = vmul.f32 %v154, 1.442695
    %v156 = vpow.pop %v155
    %v157 = vsub.f32 %v152, %v153
    %v158 = vmul.f32 %v157, 1.442695
    %v159 = vpow.pop %v158
    %v160 = vadd.f32 %v156, %v159
    %v161 = vld [vmem:[#allocation7 + $0x1] sm:$0x1]
    %v162 = vld [vmem:[#allocation7 + $0x5] sm:$0x1]
    %v163 = vld [vmem:[#allocation7 + $0x9] sm:$0x1]
    %v164 = vld [vmem:[#allocation7 + $0xd] sm:$0x1]
    %v165 = vld [vmem:[#allocation7 + $0x11] sm:$0x1]
    %v166 = vld [vmem:[#allocation7 + $0x15] sm:$0x1]
    %v167 = vld [vmem:[#allocation7 + $0x19] sm:$0x1]
    %v168 = vld [vmem:[#allocation7 + $0x1d] sm:$0x1]
    %v177 = vrot.slane %v162, 7
    %v178 = vsel %vm90, %v177, %v161
    %v179 = vrot.slane %v163, 6
    %v180 = vsel %vm93, %v179, %v178
    %v181 = vrot.slane %v164, 5
    %v182 = vsel %vm96, %v181, %v180
    %v183 = vrot.slane %v165, 4
    %v184 = vsel %vm99, %v183, %v182
    %v185 = vrot.slane %v166, 3
    %v186 = vsel %vm102, %v185, %v184
    %v187 = vrot.slane %v167, 2
    %v188 = vsel %vm105, %v187, %v186
    %v189 = vrot.slane %v168, 1
    %v190 = vsel %vm108, %v189, %v188
    %v192 = vmul.f32 %v52, %v190
    %v193 = vsel %vm55, %v192, 0.0
    %194 = vadd.xlane.f32.xlu0 %v193
    %v195 = vpop.xlane.xlu0 %194
    %v196 = vmul.f32 %v161, %v161
    %v197 = vmul.f32 %v162, %v162
    %v198 = vmul.f32 %v163, %v163
    %v199 = vmul.f32 %v164, %v164
    %v200 = vmul.f32 %v165, %v165
    %v201 = vmul.f32 %v166, %v166
    %v202 = vmul.f32 %v167, %v167
    %v203 = vmul.f32 %v168, %v168
    %v212 = vrot.slane %v197, 7
    %v213 = vsel %vm90, %v212, %v196
    %v214 = vrot.slane %v198, 6
    %v215 = vsel %vm93, %v214, %v213
    %v216 = vrot.slane %v199, 5
    %v217 = vsel %vm96, %v216, %v215
    %v218 = vrot.slane %v200, 4
    %v219 = vsel %vm99, %v218, %v217
    %v220 = vrot.slane %v201, 3
    %v221 = vsel %vm102, %v220, %v219
    %v222 = vrot.slane %v202, 2
    %v223 = vsel %vm105, %v222, %v221
    %v224 = vrot.slane %v203, 1
    %v225 = vsel %vm108, %v224, %v223
    %v227 = vsel %vm55, %v225, 0.0
    %228 = vadd.xlane.f32.xlu0 %v227
    %v229 = vpop.xlane.xlu0 %228
    %v230 = vmax.f32 %v229, 1e-16
    %v231 = vrsqrt.pop %v230
    %v232 = vmul.f32 %v195, %v68
    %v233 = vmul.f32 %v232, %v231
    %v234 = vmax.f32 %v153, %v233
    %v235 = vsub.f32 %v153, %v234
    %v236 = vmul.f32 %v235, 1.442695
    %v237 = vpow.pop %v236
    %v238 = vmul.f32 %v160, %v237
    %v239 = vsub.f32 %v233, %v234
    %v240 = vmul.f32 %v239, 1.442695
    %v241 = vpow.pop %v240
    %v242 = vadd.f32 %v238, %v241
    %v243 = vld [vmem:[#allocation7 + $0x2] sm:$0x1]
    %v244 = vld [vmem:[#allocation7 + $0x6] sm:$0x1]
    %v245 = vld [vmem:[#allocation7 + $0xa] sm:$0x1]
    %v246 = vld [vmem:[#allocation7 + $0xe] sm:$0x1]
    %v247 = vld [vmem:[#allocation7 + $0x12] sm:$0x1]
    %v248 = vld [vmem:[#allocation7 + $0x16] sm:$0x1]
    %v249 = vld [vmem:[#allocation7 + $0x1a] sm:$0x1]
    %v250 = vld [vmem:[#allocation7 + $0x1e] sm:$0x1]
    %v259 = vrot.slane %v244, 7
    %v260 = vsel %vm90, %v259, %v243
    %v261 = vrot.slane %v245, 6
    %v262 = vsel %vm93, %v261, %v260
    %v263 = vrot.slane %v246, 5
    %v264 = vsel %vm96, %v263, %v262
    %v265 = vrot.slane %v247, 4
    %v266 = vsel %vm99, %v265, %v264
    %v267 = vrot.slane %v248, 3
    %v268 = vsel %vm102, %v267, %v266
    %v269 = vrot.slane %v249, 2
    %v270 = vsel %vm105, %v269, %v268
    %v271 = vrot.slane %v250, 1
    %v272 = vsel %vm108, %v271, %v270
    %v274 = vmul.f32 %v52, %v272
    %v275 = vsel %vm55, %v274, 0.0
    %276 = vadd.xlane.f32.xlu0 %v275
    %v277 = vpop.xlane.xlu0 %276
    %v278 = vmul.f32 %v243, %v243
    %v279 = vmul.f32 %v244, %v244
    %v280 = vmul.f32 %v245, %v245
    %v281 = vmul.f32 %v246, %v246
    %v282 = vmul.f32 %v247, %v247
    %v283 = vmul.f32 %v248, %v248
    %v284 = vmul.f32 %v249, %v249
    %v285 = vmul.f32 %v250, %v250
    %v294 = vrot.slane %v279, 7
    %v295 = vsel %vm90, %v294, %v278
    %v296 = vrot.slane %v280, 6
    %v297 = vsel %vm93, %v296, %v295
    %v298 = vrot.slane %v281, 5
    %v299 = vsel %vm96, %v298, %v297
    %v300 = vrot.slane %v282, 4
    %v301 = vsel %vm99, %v300, %v299
    %v302 = vrot.slane %v283, 3
    %v303 = vsel %vm102, %v302, %v301
    %v304 = vrot.slane %v284, 2
    %v305 = vsel %vm105, %v304, %v303
    %v306 = vrot.slane %v285, 1
    %v307 = vsel %vm108, %v306, %v305
    %v309 = vsel %vm55, %v307, 0.0
    %310 = vadd.xlane.f32.xlu0 %v309
    %v311 = vpop.xlane.xlu0 %310
    %v312 = vmax.f32 %v311, 1e-16
    %v313 = vrsqrt.pop %v312
    %v314 = vmul.f32 %v277, %v68
    %v315 = vmul.f32 %v314, %v313
    %v316 = vmax.f32 %v234, %v315
    %v317 = vsub.f32 %v234, %v316
    %v318 = vmul.f32 %v317, 1.442695
    %v319 = vpow.pop %v318
    %v320 = vmul.f32 %v242, %v319
    %v321 = vsub.f32 %v315, %v316
    %v322 = vmul.f32 %v321, 1.442695
    %v323 = vpow.pop %v322
    %v324 = vadd.f32 %v320, %v323
    %v325 = vld [vmem:[#allocation7 + $0x3] sm:$0x1]
    %v326 = vld [vmem:[#allocation7 + $0x7] sm:$0x1]
    %v327 = vld [vmem:[#allocation7 + $0xb] sm:$0x1]
    %v328 = vld [vmem:[#allocation7 + $0xf] sm:$0x1]
    %v329 = vld [vmem:[#allocation7 + $0x13] sm:$0x1]
    %v330 = vld [vmem:[#allocation7 + $0x17] sm:$0x1]
    %v331 = vld [vmem:[#allocation7 + $0x1b] sm:$0x1]
    %v332 = vld [vmem:[#allocation7 + $0x1f] sm:$0x1]
    %v341 = vrot.slane %v326, 7
    %v342 = vsel %vm90, %v341, %v325
    %v343 = vrot.slane %v327, 6
    %v344 = vsel %vm93, %v343, %v342
    %v345 = vrot.slane %v328, 5
    %v346 = vsel %vm96, %v345, %v344
    %v347 = vrot.slane %v329, 4
    %v348 = vsel %vm99, %v347, %v346
    %v349 = vrot.slane %v330, 3
    %v350 = vsel %vm102, %v349, %v348
    %v351 = vrot.slane %v331, 2
    %v352 = vsel %vm105, %v351, %v350
    %v353 = vrot.slane %v332, 1
    %v354 = vsel %vm108, %v353, %v352
    %v356 = vmul.f32 %v52, %v354
    %v357 = vsel %vm55, %v356, 0.0
    %358 = vadd.xlane.f32.xlu0 %v357
    %v359 = vpop.xlane.xlu0 %358
    %v360 = vmul.f32 %v325, %v325
    %v361 = vmul.f32 %v326, %v326
    %v362 = vmul.f32 %v327, %v327
    %v363 = vmul.f32 %v328, %v328
    %v364 = vmul.f32 %v329, %v329
    %v365 = vmul.f32 %v330, %v330
    %v366 = vmul.f32 %v331, %v331
    %v367 = vmul.f32 %v332, %v332
    %v376 = vrot.slane %v361, 7
    %v377 = vsel %vm90, %v376, %v360
    %v378 = vrot.slane %v362, 6
    %v379 = vsel %vm93, %v378, %v377
    %v380 = vrot.slane %v363, 5
    %v381 = vsel %vm96, %v380, %v379
    %v382 = vrot.slane %v364, 4
    %v383 = vsel %vm99, %v382, %v381
    %v384 = vrot.slane %v365, 3
    %v385 = vsel %vm102, %v384, %v383
    %v386 = vrot.slane %v366, 2
    %v387 = vsel %vm105, %v386, %v385
    %v388 = vrot.slane %v367, 1
    %v389 = vsel %vm108, %v388, %v387
    %v391 = vsel %vm55, %v389, 0.0
    %392 = vadd.xlane.f32.xlu0 %v391
    %v393 = vpop.xlane.xlu0 %392
    %v394 = vmax.f32 %v393, 1e-16
    %v395 = vrsqrt.pop %v394
    %v396 = vmul.f32 %v359, %v68
    %v397 = vmul.f32 %v396, %v395
    %v398 = vmax.f32 %v316, %v397
    %v399 = vsub.f32 %v316, %v398
    %v400 = vmul.f32 %v399, 1.442695
    %v401 = vpow.pop %v400
    %v402 = vmul.f32 %v324, %v401
    %v403 = vsub.f32 %v397, %v398
    %v404 = vmul.f32 %v403, 1.442695
    %v405 = vpow.pop %v404
    %v406 = vadd.f32 %v402, %v405
    %v407 = vlog2.pop %v406
    %v408 = vmul.f32 %v407, 0.6931472
    %v409 = vadd.f32 %v398, %v408
    %v410 = vsub.f32 %v409, %v72
    %s411 = smul.u32 0, 8
    %v412 = vlaneseq
    %v413 = vshrl.u32 %v412, 7
    %v414 = vstv %s411
    %v415 = vadd.s32 %v414, %v413
    %vm416 = vcmp.lt.s32.totalorder %v415, 8
    %v417 = vsel %vm416, %v410, 0.0
    %vm418 = vcmask 7168
    %v419 = vsel %vm418, %v417, 0.0
    %420 = vadd.xlane.f32.xlu0 %v419
    %v421 = vpop.xlane.xlu0 %420
    %v422 = vrot.slane %v421, 4
    %v423 = vadd.f32 %v421, %v422
    %v424 = vrot.slane %v423, 2
    %v425 = vadd.f32 %v423, %v424
    %v426 = vrot.slane %v425, 1
    %v427 = vadd.f32 %v425, %v426
    %s428 = vtos %v427
    %v429 = vstv %s428
    %430 = vst [vmem:[#allocation8] sm:$0xff] %v429
    // Predicated region
    $region26: #{tpu_custom_call.1} parent=1 // pred_check
      _
    $region27: #{tpu_custom_call.1} parent=1 // pred_check_branch
      %432 = sbr.rel (0) target = $region29
    $region28: #{tpu_custom_call.1} parent=1 // pred_region
      %s434 = ssub.s32 128, 128
      %435 = vsyncadd [#allocation4], %s434
      %s437 = sshll.u32 [#allocation8], 4
      %s438 = int_to_ptr.vmem [resolvable:$true] %s437
      %440 = dma.vmem_to_hbm [thread:$0]  %s438, 128, %s3, [#allocation4]
    $region29: #{tpu_custom_call.1} parent=1 // pred_fallthru
      _
    // Predicated region
    $region30: #{tpu_custom_call.1} parent=1 // pred_check
      _
    $region31: #{tpu_custom_call.1} parent=1 // pred_check_branch
      %442 = sbr.rel (0) target = $region33
    $region32: #{tpu_custom_call.1} parent=1 // pred_region
      %443 = dma.done [#allocation4], 128
    $region33: #{tpu_custom_call.1} parent=1 // pred_fallthru
      _
    %444 = vsyncpa [#allocation3], 1
    %445 = vsyncpa [#allocation6], 1
    %446 = vsyncpa [#allocation4], 1

</llo_original>
